<compile_context>
chip_gen: v7x
topology: tpu7x:2x2x1
jax: 0.10.0
libtpu: 0.0.40
codegen_flags: <defaults>
</compile_context>

<pallas_src>
import functools

import jax
import jax.numpy as jnp
import numpy as np
from jax.experimental import pallas as pl
from jax.experimental.pallas import tpu as pltpu


def _ce_kernel(feat_ref, mask_ref, emb_ref, w_ref, loss_ref,
               *, num_classes, inv_temp, ignore_index):
    # feat_ref : (B, A, TM)   f32  pixels on the lane axis
    # mask_ref : (B, TM)      i32
    # emb_ref  : (C_pad, A)   f32  text_embedding, zero-padded classes (sublanes)
    # w_ref    : (C_pad, 1)   f32  per-class weight * loss_weight, zero-padded
    # loss_ref : (B, TM)      f32  lane-dense per-pixel loss
    bsz, _, tm = feat_ref.shape
    c_pad = emb_ref.shape[0]

    emb = emb_ref[...]                       # (C_pad, A)
    w = w_ref[...]                           # (C_pad, 1)
    y_all = mask_ref[...]                    # (B, TM)

    cls = jax.lax.broadcasted_iota(jnp.int32, (c_pad, tm), 0)
    cls_valid = cls < num_classes            # mask out padded class rows

    for b in range(bsz):                     # B is small & static -> unrolled
        # logits[c, p] = <text_embedding[c], feat[:, p]> / temp   -> (C_pad, TM)
        logits = jnp.dot(emb, feat_ref[b],
                         preferred_element_type=jnp.float32) * inv_temp
        logits = jnp.where(cls_valid, logits, -1e30)   # f32-safe sentinel

        y = y_all[b:b + 1, :]                # (1, TM)

        # numerically-stable log-sum-exp over the class (sublane) axis
        m = jnp.max(logits, axis=0, keepdims=True)                       # (1, TM)
        lse = m + jnp.log(jnp.sum(jnp.exp(logits - m), axis=0,
                                  keepdims=True))                        # (1, TM)

        onehot = cls == y                                                # (C_pad, TM)
        picked = jnp.sum(jnp.where(onehot, logits, 0.0), axis=0,
                         keepdims=True)                                  # (1, TM)
        w_y = jnp.sum(jnp.where(onehot, w, 0.0), axis=0, keepdims=True)  # (1, TM)

        valid = jnp.logical_and(
            jnp.logical_and(y >= 0, y < num_classes), y != ignore_index)
        loss = jnp.where(valid, w_y * (lse - picked), 0.0)               # (1, TM)
        loss_ref[b:b + 1, :] = loss


def _nearest_resize(mask, out_h, out_w):
    # Matches F.interpolate(mode='nearest'): src = floor(i * in / out)
    b, c, in_h, in_w = mask.shape
    if (in_h, in_w) == (out_h, out_w):
        return mask
    rows = (jnp.arange(out_h) * in_h // out_h).astype(jnp.int32)
    cols = (jnp.arange(out_w) * in_w // out_w).astype(jnp.int32)
    return mask[:, :, rows[:, None], cols[None, :]]


def alignment_loss(feat, mask, text_embedding, weight=None, *,
                   contrast_temp=1.0, loss_weight=1.0,
                   num_classes=19, ignore_index=255, tm=1024):
    """Forward pass of AlignmentLoss (reduction='none', use_avg_pool=False)."""
    B, A, H, W = feat.shape
    C, A2 = text_embedding.shape
    assert A == A2 and C == num_classes
    HW = H * W

    # Pixel tile on the lane axis: multiple of 128, capped at aligned H*W.
    hw_aligned = ((HW + 127) // 128) * 128
    tm_eff = max(128, min((int(tm) // 128) * 128, hw_aligned))
    n_tiles = (HW + tm_eff - 1) // tm_eff
    hw_pad = n_tiles * tm_eff

    # feat: NCHW viewed as (B, A, H*W) -- metadata-only reshape, no HBM copy.
    feat_r = feat.reshape(B, A, HW)
    if feat_r.dtype != jnp.float32:
        feat_r = feat_r.astype(jnp.float32)

    # mask: nearest-resize to feat spatial size, flatten, pad with ignore_index
    # (only the tiny int32 mask gets padded; feat's ragged tail is a partial
    #  input block whose garbage lanes are forced to 0 by the ignore mask and
    #  sliced off below).
    mask_r = _nearest_resize(mask.astype(jnp.int32), H, W).reshape(B, HW)
    if hw_pad != HW:
        mask_r = jnp.pad(mask_r, ((0, 0), (0, hw_pad - HW)),
                         constant_values=ignore_index)

    # Class-padded text embedding (classes on the sublane axis) + fused weights.
    c_pad = max(8, ((C + 7) // 8) * 8)
    emb_pad = jnp.zeros((c_pad, A), jnp.float32).at[:C].set(
        text_embedding.astype(jnp.float32))
    w_full = (jnp.ones((C,), jnp.float32) if weight is None
              else weight.astype(jnp.float32))
    # Fold loss_weight into the per-class weight (tiny constant array).
    w_pad = jnp.zeros((c_pad, 1), jnp.float32).at[:C, 0].set(
        w_full * jnp.float32(loss_weight))

    kernel = functools.partial(
        _ce_kernel, num_classes=num_classes,
        inv_temp=float(1.0 / contrast_temp), ignore_index=ignore_index)

    loss = pl.pallas_call(
        kernel,
        out_shape=jax.ShapeDtypeStruct((B, hw_pad), jnp.float32),
        grid_spec=pltpu.PrefetchScalarGridSpec(
            num_scalar_prefetch=0,
            grid=(n_tiles,),
            in_specs=[
                pl.BlockSpec((B, A, tm_eff), lambda i: (0, 0, i)),
                pl.BlockSpec((B, tm_eff), lambda i: (0, i)),
                pl.BlockSpec((c_pad, A), lambda i: (0, 0)),
                pl.BlockSpec((c_pad, 1), lambda i: (0, 0)),
            ],
            out_specs=pl.BlockSpec((B, tm_eff), lambda i: (0, i)),
        ),
        compiler_params=pltpu.CompilerParams(
            dimension_semantics=("parallel",)),
    )(feat_r, mask_r, emb_pad, w_pad)

    # loss_weight is already folded into w_pad.
    return loss[:, :HW].reshape(-1)


def _reference(feat, mask, text_embedding, weight, num_classes, contrast_temp,
               loss_weight, ignore_index):
    B, A, H, W = feat.shape
    mask_r = _nearest_resize(mask.astype(jnp.int32), H, W)
    f = jnp.transpose(feat, (0, 2, 3, 1)).reshape(-1, A).astype(jnp.float32)
    y = mask_r.reshape(-1)
    logits = (f @ text_embedding.astype(jnp.float32).T) * (1.0 / contrast_temp)
    logz = jax.scipy.special.logsumexp(logits, axis=-1)
    y_safe = jnp.where(y == ignore_index, 0, y)
    picked = jnp.take_along_axis(logits, y_safe[:, None], axis=-1)[:, 0]
    w = (jnp.ones((num_classes,), jnp.float32) if weight is None
         else weight.astype(jnp.float32))
    loss = w[y_safe] * (logz - picked)
    loss = jnp.where(y == ignore_index, 0.0, loss)
    return loss_weight * loss


if __name__ == "__main__":
    key = jax.random.PRNGKey(0)
    B, A, H, W = 2, 32, 16, 16
    num_classes = 19

    k1, k2, k3 = jax.random.split(key, 3)
    feat = jax.random.normal(k1, (B, A, H, W), jnp.float32)
    mask = jax.random.randint(k2, (B, 1, H, W), 0, num_classes, jnp.int32)
    text_embedding = jax.random.normal(k3, (num_classes, A), jnp.float32)

    # Test 1: unweighted, no ignore pixels (matches PyTorch exactly).
    out = alignment_loss(feat, mask, text_embedding,
                         contrast_temp=1.0, loss_weight=1.0,
                         num_classes=num_classes)
    out = jax.block_until_ready(out)
    ref = _reference(feat, mask, text_embedding, None, num_classes,
                     contrast_temp=1.0, loss_weight=1.0, ignore_index=255)
    np.testing.assert_allclose(np.asarray(out), np.asarray(ref),
                               rtol=1e-5, atol=1e-5)

    # Test 2: per-class weights, ignore pixels, temp and loss_weight != 1.
    w_vec = jax.random.uniform(jax.random.PRNGKey(1), (num_classes,),
                               jnp.float32) + 0.5
    mask2 = mask.at[0, 0, :4, :4].set(255)
    out2 = alignment_loss(feat, mask2, text_embedding, weight=w_vec,
                          contrast_temp=2.0, loss_weight=2.0,
                          num_classes=num_classes)
    out2 = jax.block_until_ready(out2)
    ref2 = _reference(feat, mask2, text_embedding, w_vec, num_classes,
                      contrast_temp=2.0, loss_weight=2.0, ignore_index=255)
    np.testing.assert_allclose(np.asarray(out2), np.asarray(ref2),
                               rtol=1e-5, atol=1e-5)

    print("KERNEL_OK")
</pallas_src>

<mosaic_0001>
module attributes {stable_mosaic.version = 11 : i64} {
  func.func @_ce_kernel(%arg0: i32, %arg1: memref<2x32x256xf32, #tpu.memory_space<vmem>>, %arg2: memref<2x256xi32, #tpu.memory_space<vmem>>, %arg3: memref<24x32xf32, #tpu.memory_space<vmem>>, %arg4: memref<24x1xf32, #tpu.memory_space<vmem>>, %arg5: memref<2x256xf32, #tpu.memory_space<vmem>>) attributes {dimension_semantics = [#tpu.dimension_semantics<parallel>], iteration_bounds = array<i64: 1>, scalar_prefetch = 0 : i64, scratch_operands = 0 : i64, tpu.core_type = #tpu.core_type<tc>, window_params = [{transform_indices = @transform_0, window_bounds = array<i64: 2, 32, 256>}, {transform_indices = @transform_1, window_bounds = array<i64: 2, 256>}, {pipeline_mode = #tpu.pipeline_mode<synchronous>, transform_indices = @transform_2, window_bounds = array<i64: 24, 32>}, {pipeline_mode = #tpu.pipeline_mode<synchronous>, transform_indices = @transform_3, window_bounds = array<i64: 24, 1>}, {transform_indices = @transform_4, window_bounds = array<i64: 2, 256>}]} {
    %c0 = arith.constant 0 : index
    %c0_0 = arith.constant 0 : index
    %0 = vector.load %arg3[%c0, %c0_0] : memref<24x32xf32, #tpu.memory_space<vmem>>, vector<24x32xf32>
    %c0_1 = arith.constant 0 : index
    %c0_2 = arith.constant 0 : index
    %1 = vector.load %arg4[%c0_1, %c0_2] : memref<24x1xf32, #tpu.memory_space<vmem>>, vector<24x1xf32>
    %c0_3 = arith.constant 0 : index
    %c0_4 = arith.constant 0 : index
    %2 = vector.load %arg2[%c0_3, %c0_4] : memref<2x256xi32, #tpu.memory_space<vmem>>, vector<2x256xi32>
    %3 = tpu.iota {dimensions = array<i32: 0>} : vector<24x256xi32>
    %c19_i32 = arith.constant 19 : i32
    %4 = vector.broadcast %c19_i32 : i32 to vector<24x256xi32>
    %5 = arith.cmpi slt, %3, %4 : vector<24x256xi32>
    %c0_5 = arith.constant 0 : index
    %c0_6 = arith.constant 0 : index
    %c0_7 = arith.constant 0 : index
    %6 = vector.load %arg1[%c0_5, %c0_6, %c0_7] : memref<2x32x256xf32, #tpu.memory_space<vmem>>, vector<1x32x256xf32>
    %7 = vector.shape_cast %6 : vector<1x32x256xf32> to vector<32x256xf32>
    %cst = arith.constant dense<0.000000e+00> : vector<24x256xf32>
    %8 = tpu.matmul %0, %7, %cst {dimension_numbers = #tpu.dot_dimension_numbers<[1], [0], [0], [1], [0, 0, 1, 1], [], []>} : vector<24x32xf32>, vector<32x256xf32>, vector<24x256xf32> -> vector<24x256xf32>
    %cst_8 = arith.constant 1.000000e+00 : f32
    %9 = vector.broadcast %cst_8 : f32 to vector<24x256xf32>
    %10 = arith.mulf %8, %9 : vector<24x256xf32>
    %cst_9 = arith.constant -1.000000e+30 : f32
    %11 = vector.broadcast %cst_9 : f32 to vector<24x256xf32>
    %12 = arith.select %5, %10, %11 : vector<24x256xi1>, vector<24x256xf32>
    %13 = vector.extract_strided_slice %2 {offsets = [0, 0], sizes = [1, 256], strides = [1, 1]} : vector<2x256xi32> to vector<1x256xi32>
    %cst_10 = arith.constant dense<0xFF800000> : vector<256xf32>
    %14 = vector.multi_reduction <maximumf>, %12, %cst_10 [0] : vector<24x256xf32> to vector<256xf32>
    %15 = vector.shape_cast %14 : vector<256xf32> to vector<1x256xf32>
    %16 = vector.broadcast %15 : vector<1x256xf32> to vector<24x256xf32>
    %17 = arith.subf %12, %16 : vector<24x256xf32>
    %18 = math.exp %17 : vector<24x256xf32>
    %cst_11 = arith.constant dense<0.000000e+00> : vector<256xf32>
    %19 = vector.multi_reduction <add>, %18, %cst_11 [0] : vector<24x256xf32> to vector<256xf32>
    %20 = vector.shape_cast %19 : vector<256xf32> to vector<1x256xf32>
    %21 = math.log %20 : vector<1x256xf32>
    %22 = arith.addf %15, %21 : vector<1x256xf32>
    %23 = vector.broadcast %13 : vector<1x256xi32> to vector<24x256xi32>
    %24 = arith.cmpi eq, %3, %23 : vector<24x256xi32>
    %cst_12 = arith.constant 0.000000e+00 : f32
    %25 = vector.broadcast %cst_12 : f32 to vector<24x256xf32>
    %26 = arith.select %24, %12, %25 : vector<24x256xi1>, vector<24x256xf32>
    %cst_13 = arith.constant dense<0.000000e+00> : vector<256xf32>
    %27 = vector.multi_reduction <add>, %26, %cst_13 [0] : vector<24x256xf32> to vector<256xf32>
    %28 = vector.shape_cast %27 : vector<256xf32> to vector<1x256xf32>
    %cst_14 = arith.constant 0.000000e+00 : f32
    %29 = vector.shape_cast %1 : vector<24x1xf32> to vector<24x1xf32>
    %30 = vector.broadcast %29 : vector<24x1xf32> to vector<24x256xf32>
    %31 = vector.broadcast %cst_14 : f32 to vector<24x256xf32>
    %32 = arith.select %24, %30, %31 : vector<24x256xi1>, vector<24x256xf32>
    %cst_15 = arith.constant dense<0.000000e+00> : vector<256xf32>
    %33 = vector.multi_reduction <add>, %32, %cst_15 [0] : vector<24x256xf32> to vector<256xf32>
    %34 = vector.shape_cast %33 : vector<256xf32> to vector<1x256xf32>
    %c0_i32 = arith.constant 0 : i32
    %35 = vector.broadcast %c0_i32 : i32 to vector<1x256xi32>
    %36 = arith.cmpi sge, %13, %35 : vector<1x256xi32>
    %c19_i32_16 = arith.constant 19 : i32
    %37 = vector.broadcast %c19_i32_16 : i32 to vector<1x256xi32>
    %38 = arith.cmpi slt, %13, %37 : vector<1x256xi32>
    %39 = arith.andi %36, %38 : vector<1x256xi1>
    %c255_i32 = arith.constant 255 : i32
    %40 = vector.broadcast %c255_i32 : i32 to vector<1x256xi32>
    %41 = arith.cmpi ne, %13, %40 : vector<1x256xi32>
    %42 = arith.andi %39, %41 : vector<1x256xi1>
    %43 = arith.subf %22, %28 : vector<1x256xf32>
    %44 = arith.mulf %34, %43 : vector<1x256xf32>
    %cst_17 = arith.constant 0.000000e+00 : f32
    %45 = vector.broadcast %cst_17 : f32 to vector<1x256xf32>
    %46 = arith.select %42, %44, %45 : vector<1x256xi1>, vector<1x256xf32>
    %c0_18 = arith.constant 0 : index
    %c0_19 = arith.constant 0 : index
    %47 = vector.load %arg5[%c0_18, %c0_19] : memref<2x256xf32, #tpu.memory_space<vmem>>, vector<1x256xf32>
    tpu.vector_store %arg5[%c0_18, %c0_19], %46 {strides = array<i32>} : memref<2x256xf32, #tpu.memory_space<vmem>>, vector<1x256xf32>,
    %c1 = arith.constant 1 : index
    %c0_20 = arith.constant 0 : index
    %c0_21 = arith.constant 0 : index
    %48 = vector.load %arg1[%c1, %c0_20, %c0_21] : memref<2x32x256xf32, #tpu.memory_space<vmem>>, vector<1x32x256xf32>
    %49 = vector.shape_cast %48 : vector<1x32x256xf32> to vector<32x256xf32>
    %cst_22 = arith.constant dense<0.000000e+00> : vector<24x256xf32>
    %50 = tpu.matmul %0, %49, %cst_22 {dimension_numbers = #tpu.dot_dimension_numbers<[1], [0], [0], [1], [0, 0, 1, 1], [], []>} : vector<24x32xf32>, vector<32x256xf32>, vector<24x256xf32> -> vector<24x256xf32>
    %cst_23 = arith.constant 1.000000e+00 : f32
    %51 = vector.broadcast %cst_23 : f32 to vector<24x256xf32>
    %52 = arith.mulf %50, %51 : vector<24x256xf32>
    %cst_24 = arith.constant -1.000000e+30 : f32
    %53 = vector.broadcast %cst_24 : f32 to vector<24x256xf32>
    %54 = arith.select %5, %52, %53 : vector<24x256xi1>, vector<24x256xf32>
    %55 = vector.extract_strided_slice %2 {offsets = [1, 0], sizes = [1, 256], strides = [1, 1]} : vector<2x256xi32> to vector<1x256xi32>
    %cst_25 = arith.constant dense<0xFF800000> : vector<256xf32>
    %56 = vector.multi_reduction <maximumf>, %54, %cst_25 [0] : vector<24x256xf32> to vector<256xf32>
    %57 = vector.shape_cast %56 : vector<256xf32> to vector<1x256xf32>
    %58 = vector.broadcast %57 : vector<1x256xf32> to vector<24x256xf32>
    %59 = arith.subf %54, %58 : vector<24x256xf32>
    %60 = math.exp %59 : vector<24x256xf32>
    %cst_26 = arith.constant dense<0.000000e+00> : vector<256xf32>
    %61 = vector.multi_reduction <add>, %60, %cst_26 [0] : vector<24x256xf32> to vector<256xf32>
    %62 = vector.shape_cast %61 : vector<256xf32> to vector<1x256xf32>
    %63 = math.log %62 : vector<1x256xf32>
    %64 = arith.addf %57, %63 : vector<1x256xf32>
    %65 = vector.broadcast %55 : vector<1x256xi32> to vector<24x256xi32>
    %66 = arith.cmpi eq, %3, %65 : vector<24x256xi32>
    %cst_27 = arith.constant 0.000000e+00 : f32
    %67 = vector.broadcast %cst_27 : f32 to vector<24x256xf32>
    %68 = arith.select %66, %54, %67 : vector<24x256xi1>, vector<24x256xf32>
    %cst_28 = arith.constant dense<0.000000e+00> : vector<256xf32>
    %69 = vector.multi_reduction <add>, %68, %cst_28 [0] : vector<24x256xf32> to vector<256xf32>
    %70 = vector.shape_cast %69 : vector<256xf32> to vector<1x256xf32>
    %cst_29 = arith.constant 0.000000e+00 : f32
    %71 = vector.shape_cast %1 : vector<24x1xf32> to vector<24x1xf32>
    %72 = vector.broadcast %71 : vector<24x1xf32> to vector<24x256xf32>
    %73 = vector.broadcast %cst_29 : f32 to vector<24x256xf32>
    %74 = arith.select %66, %72, %73 : vector<24x256xi1>, vector<24x256xf32>
    %cst_30 = arith.constant dense<0.000000e+00> : vector<256xf32>
    %75 = vector.multi_reduction <add>, %74, %cst_30 [0] : vector<24x256xf32> to vector<256xf32>
    %76 = vector.shape_cast %75 : vector<256xf32> to vector<1x256xf32>
    %c0_i32_31 = arith.constant 0 : i32
    %77 = vector.broadcast %c0_i32_31 : i32 to vector<1x256xi32>
    %78 = arith.cmpi sge, %55, %77 : vector<1x256xi32>
    %c19_i32_32 = arith.constant 19 : i32
    %79 = vector.broadcast %c19_i32_32 : i32 to vector<1x256xi32>
    %80 = arith.cmpi slt, %55, %79 : vector<1x256xi32>
    %81 = arith.andi %78, %80 : vector<1x256xi1>
    %c255_i32_33 = arith.constant 255 : i32
    %82 = vector.broadcast %c255_i32_33 : i32 to vector<1x256xi32>
    %83 = arith.cmpi ne, %55, %82 : vector<1x256xi32>
    %84 = arith.andi %81, %83 : vector<1x256xi1>
    %85 = arith.subf %64, %70 : vector<1x256xf32>
    %86 = arith.mulf %76, %85 : vector<1x256xf32>
    %cst_34 = arith.constant 0.000000e+00 : f32
    %87 = vector.broadcast %cst_34 : f32 to vector<1x256xf32>
    %88 = arith.select %84, %86, %87 : vector<1x256xi1>, vector<1x256xf32>
    %c1_35 = arith.constant 1 : index
    %c0_36 = arith.constant 0 : index
    %89 = vector.load %arg5[%c1_35, %c0_36] : memref<2x256xf32, #tpu.memory_space<vmem>>, vector<1x256xf32>
    tpu.vector_store %arg5[%c1_35, %c0_36], %88 {strides = array<i32>} : memref<2x256xf32, #tpu.memory_space<vmem>>, vector<1x256xf32>,
    return
  }
  func.func @transform_0(%arg0: i32) -> (i32, i32, i32) {
    %c0_i32 = arith.constant 0 : i32
    %c0_i32_0 = arith.constant 0 : i32
    %c0_i32_1 = arith.constant 0 : i32
    return %c0_i32, %c0_i32_0, %arg0 : i32, i32, i32
  }
  func.func @transform_1(%arg0: i32) -> (i32, i32) {
    %c0_i32 = arith.constant 0 : i32
    %c0_i32_0 = arith.constant 0 : i32
    return %c0_i32, %arg0 : i32, i32
  }
  func.func @transform_2(%arg0: i32) -> (i32, i32) {
    %c0_i32 = arith.constant 0 : i32
    %c0_i32_0 = arith.constant 0 : i32
    %c0_i32_1 = arith.constant 0 : i32
    return %c0_i32, %c0_i32_0 : i32, i32
  }
  func.func @transform_3(%arg0: i32) -> (i32, i32) {
    %c0_i32 = arith.constant 0 : i32
    %c0_i32_0 = arith.constant 0 : i32
    %c0_i32_1 = arith.constant 0 : i32
    return %c0_i32, %c0_i32_0 : i32, i32
  }
  func.func @transform_4(%arg0: i32) -> (i32, i32) {
    %c0_i32 = arith.constant 0 : i32
    %c0_i32_0 = arith.constant 0 : i32
    return %c0_i32, %arg0 : i32, i32
  }
}

</mosaic_0001>

<llo_original>
// kernel: tpu_custom_call.1
$region0: #{tpu_custom_call.1}
  #allocation0 [shape = 'u32[]', space=smem, size = 0x4, offset = 0x4, fixed_abs, tag = 'smem constant byte address 0x4 - core index']
  #allocation1 [shape = 'u32[144,128]{1,0:T(1,128)}', space=vmem, size = 0x12000, scoped, tag = 'internal scratch']
  %s0 = inlined_call_operand.hbm [shape: f32[2,32,256], index: 0, kind: input, shape index: {}]
  %s1 = inlined_call_operand.vmem [shape: s32[2,256], index: 1, kind: input, shape index: {}]
  %s2 = inlined_call_operand.vmem [shape: f32[24,32], index: 2, kind: input, shape index: {}]
  %s3 = inlined_call_operand.vmem [shape: f32[24,1], index: 3, kind: input, shape index: {}]
  %s4 = inlined_call_operand.hbm [shape: f32[2,256], index: 4, kind: output, shape index: {}]
  %s5 = sld [smem:[#allocation0]]
  $region30: #{tpu_custom_call.1} parent=0
    _
  %s7 = ssub.s32 1, %s5
  %s8 = scalar_select 0, %s7, %s5
  $region1: #{tpu_custom_call.1} parent=0
    #allocation2 [shape = 'u8[65536]{0}', space=vmem, size = 0x10000, scoped, tag = 'input window, operand 0, single buffered']
    #allocation3 [shape = 's32[1]{0}', space=sflag, size = 0x4, scoped, tag = 'scoped memory for tpu_custom_call.1']
    #allocation4 [shape = 's32[1]{0}', space=sflag, size = 0x4, scoped, tag = 'scoped memory for tpu_custom_call.1']
    #allocation5 [shape = 'u8[2048]{0}', space=vmem, size = 0x800, scoped, tag = 'output window, operand 0, single buffered']
    %9 = vsyncpa [#allocation3], 0
    %10 = vsyncpa [#allocation4], 0
    // Predicated region
    $region2: #{tpu_custom_call.1} parent=1 // pred_check
      _
    $region3: #{tpu_custom_call.1} parent=1 // pred_check_branch
      %12 = sbr.rel (0) target = $region5
    $region4: #{tpu_custom_call.1} parent=1 // pred_region
      %s14 = ssub.s32 2048, 2048
      %15 = vsyncadd [#allocation3], %s14
      %s16 = sshll.u32 [#allocation2], 4
      %s17 = int_to_ptr.vmem [resolvable:$true] %s16
      %22 = dma.hbm_to_vmem [thread:$0]  %s0, 2048, %s17, [#allocation3], 256, 256, 16
    $region5: #{tpu_custom_call.1} parent=1 // pred_fallthru
      _
    // Predicated region
    $region6: #{tpu_custom_call.1} parent=1 // pred_check
      _
    $region7: #{tpu_custom_call.1} parent=1 // pred_check_branch
      %24 = sbr.rel (0) target = $region9
    $region8: #{tpu_custom_call.1} parent=1 // pred_region
      _
    $region9: #{tpu_custom_call.1} parent=1 // pred_fallthru
      _
    // Predicated region
    $region10: #{tpu_custom_call.1} parent=1 // pred_check
      _
    $region11: #{tpu_custom_call.1} parent=1 // pred_check_branch
      %26 = sbr.rel (0) target = $region13
    $region12: #{tpu_custom_call.1} parent=1 // pred_region
      _
    $region13: #{tpu_custom_call.1} parent=1 // pred_fallthru
      _
    // Predicated region
    $region14: #{tpu_custom_call.1} parent=1 // pred_check
      _
    $region15: #{tpu_custom_call.1} parent=1 // pred_check_branch
      %28 = sbr.rel (0) target = $region17
    $region16: #{tpu_custom_call.1} parent=1 // pred_region
      _
    $region17: #{tpu_custom_call.1} parent=1 // pred_fallthru
      _
    // Predicated region
    $region18: #{tpu_custom_call.1} parent=1 // pred_check
      _
    $region19: #{tpu_custom_call.1} parent=1 // pred_check_branch
      %30 = sbr.rel (0) target = $region21
    $region20: #{tpu_custom_call.1} parent=1 // pred_region
      %31 = dma.done [#allocation3], 2048
    $region21: #{tpu_custom_call.1} parent=1 // pred_fallthru
      _
    %v32 = vld [vmem:[%s2] sm:$0xff]
    %v33 = vld [vmem:[%s2 + $0x8] sm:$0xff]
    %v34 = vld [vmem:[%s2 + $0x10] sm:$0xff]
    %v35 = vld [vmem:[%s3] sm:$0xff]
    %v36 = vld [vmem:[%s3 + $0x8] sm:$0xff]
    %v37 = vld [vmem:[%s3 + $0x10] sm:$0xff]
    %v38 = vld [vmem:[%s1] sm:$0xf]
    %v39 = vlaneseq
    %v40 = vshrl.u32 %v39, 7
    %v41 = vadd.s32 %v40, 8
    %v42 = vadd.s32 %v40, 16
    %vm43 = vcmp.lt.s32.totalorder %v40, 19
    %vm44 = vcmp.lt.s32.totalorder %v41, 19
    %vm45 = vcmp.lt.s32.totalorder %v42, 19
    %v46 = vld [vmem:[#allocation2] sm:$0xff]
    %v47 = vld [vmem:[#allocation2 + $0x8] sm:$0xff]
    %v48 = vld [vmem:[#allocation2 + $0x10] sm:$0xff]
    %v49 = vld [vmem:[#allocation2 + $0x18] sm:$0xff]
    %v50 = vld [vmem:[#allocation2 + $0x20] sm:$0xff]
    %v51 = vld [vmem:[#allocation2 + $0x28] sm:$0xff]
    %v52 = vld [vmem:[#allocation2 + $0x30] sm:$0xff]
    %v53 = vld [vmem:[#allocation2 + $0x38] sm:$0xff]
    %vm54 = vcmask 261120
    %v56 = vsel %vm54, %v32, 0
    %v59 = vsel %vm54, %v33, 0
    %v62 = vsel %vm54, %v34, 0
    %64 = vmatprep.subr.mxu0 %v47
    %65 = vmatpush1.msra.mxu0 %v46
    %66 = vmatprep.subr.mxu0 %v49
    %67 = vmatpush1.msra.mxu0 %v48
    %68 = vmatprep.subr.mxu0 %v51
    %69 = vmatpush1.msra.mxu0 %v50
    %70 = vmatprep.subr.mxu0 %v53
    %71 = vmatpush1.msra.mxu0 %v52
    %72 = vmatprep.subr.mxu0 0.0
    %73 = vmatpush1.msra.mxu0 0.0
    %74 = vmatprep.subr.mxu0 0.0
    %75 = vmatpush1.msra.mxu0 0.0
    %76 = vmatprep.subr.mxu0 0.0
    %77 = vmatpush1.msra.mxu0 0.0
    %78 = vmatprep.subr.mxu0 0.0
    %79 = vmatpush1.msra.mxu0 0.0
    %80 = vmatprep.subr.mxu0 0.0
    %81 = vmatpush1.msra.mxu0 0.0
    %82 = vmatprep.subr.mxu0 0.0
    %83 = vmatpush1.msra.mxu0 0.0
    %84 = vmatprep.subr.mxu0 0.0
    %85 = vmatpush1.msra.mxu0 0.0
    %86 = vmatprep.subr.mxu0 0.0
    %87 = vmatpush1.msra.mxu0 0.0
    %88 = vmatprep.subr.mxu0 0.0
    %89 = vmatpush1.msra.mxu0 0.0
    %90 = vmatprep.subr.mxu0 0.0
    %91 = vmatpush1.msra.mxu0 0.0
    %92 = vmatprep.subr.mxu0 0.0
    %93 = vmatpush1.msra.mxu0 0.0
    %94 = vmatprep.subr.mxu0 0.0
    %95 = vmatpush1.msra.mxu0 0.0
    %96 = vmatprep.subr.mxu0 0.0
    %97 = vmatpush1.msra.mxu0 0.0
    %98 = vmatprep.subr.mxu0 0.0
    %99 = vmatpush1.msra.mxu0 0.0
    %100 = vmatprep.subr.mxu0 0.0
    %101 = vmatpush1.msra.mxu0 0.0
    %102 = vmatprep.subr.mxu0 0.0
    %103 = vmatpush1.msra.mxu0 0.0
    %104 = vmatprep.subr.mxu0 0.0
    %105 = vmatpush1.msra.mxu0 0.0
    %106 = vmatprep.subr.mxu0 0.0
    %107 = vmatpush1.msra.mxu0 0.0
    %108 = vmatprep.subr.mxu0 0.0
    %109 = vmatpush1.msra.mxu0 0.0
    %110 = vmatprep.subr.mxu0 0.0
    %111 = vmatpush1.msra.mxu0 0.0
    %112 = vmatprep.subr.mxu0 0.0
    %113 = vmatpush1.msra.mxu0 0.0
    %114 = vmatprep.subr.mxu0 0.0
    %115 = vmatpush1.msra.mxu0 0.0
    %116 = vmatprep.subr.mxu0 0.0
    %117 = vmatpush1.msra.mxu0 0.0
    %118 = vmatprep.subr.mxu0 0.0
    %119 = vmatpush1.msra.mxu0 0.0
    %120 = vmatprep.subr.mxu0 0.0
    %121 = vmatpush1.msra.mxu0 0.0
    %122 = vmatprep.subr.mxu0 0.0
    %123 = vmatpush1.msra.mxu0 0.0
    %124 = vmatprep.subr.mxu0 0.0
    %125 = vmatpush1.msra.mxu0 0.0
    %126 = vmatprep.subr.mxu0 0.0
    %127 = vmatpush1.msra.mxu0 0.0
    %128 = vmatprep.mubr.f32.mxu0 0.0
    %129 = vmatmul.mubr.f32.gmra.mrb[0].mxu0 %v56
    %v130 = vpop.f32.mrb[0].mxu0
    %v131 = vadd.f32 0.0, %v130
    %v132 = vpop.f32.mrb[0].mxu0
    %v133 = vadd.f32 0.0, %v132
    %134 = vmatprep.mubr.f32.mxu0 0.0
    %135 = vmatmul.mubr.f32.gmra.mrb[0].mxu0 %v59
    %v136 = vpop.f32.mrb[0].mxu0
    %v137 = vadd.f32 0.0, %v136
    %v138 = vpop.f32.mrb[0].mxu0
    %v139 = vadd.f32 0.0, %v138
    %140 = vmatprep.mubr.f32.mxu0 0.0
    %141 = vmatmul.mubr.f32.gmra.mrb[0].mxu0 %v62
    %v142 = vpop.f32.mrb[0].mxu0
    %v143 = vadd.f32 0.0, %v142
    %v144 = vpop.f32.mrb[0].mxu0
    %v145 = vadd.f32 0.0, %v144
    %146 = vdwg.mxu0
    %v147 = vsel %vm43, %v131, -1e+30
    %v148 = vsel %vm43, %v133, -1e+30
    %v149 = vsel %vm44, %v137, -1e+30
    %v150 = vsel %vm44, %v139, -1e+30
    %v151 = vsel %vm45, %v143, -1e+30
    %v152 = vsel %vm45, %v145, -1e+30
    %v153 = vmax.f32 %v147, %v151
    %v154 = vmax.f32 %v153, %v149
    %v155 = vrot.slane %v154, 4
    %v156 = vmax.f32 %v154, %v155
    %v157 = vrot.slane %v156, 2
    %v158 = vmax.f32 %v156, %v157
    %v159 = vrot.slane %v158, 1
    %v160 = vmax.f32 %v158, %v159
    %v161 = vmax.f32 %v148, %v152
    %v162 = vmax.f32 %v161, %v150
    %v163 = vrot.slane %v162, 4
    %v164 = vmax.f32 %v162, %v163
    %v165 = vrot.slane %v164, 2
    %v166 = vmax.f32 %v164, %v165
    %v167 = vrot.slane %v166, 1
    %v168 = vmax.f32 %v166, %v167
    %v169 = vsub.f32 %v147, %v160
    %v170 = vsub.f32 %v148, %v168
    %v171 = vsub.f32 %v149, %v160
    %v172 = vsub.f32 %v150, %v168
    %v173 = vsub.f32 %v151, %v160
    %v174 = vsub.f32 %v152, %v168
    %v175 = vmul.f32 %v169, 1.442695
    %v176 = vpow.pop %v175
    %v177 = vmul.f32 %v170, 1.442695
    %v178 = vpow.pop %v177
    %v179 = vmul.f32 %v171, 1.442695
    %v180 = vpow.pop %v179
    %v181 = vmul.f32 %v172, 1.442695
    %v182 = vpow.pop %v181
    %v183 = vmul.f32 %v173, 1.442695
    %v184 = vpow.pop %v183
    %v185 = vmul.f32 %v174, 1.442695
    %v186 = vpow.pop %v185
    %v187 = vadd.f32 %v176, %v180
    %v188 = vadd.f32 %v187, %v184
    %v189 = vrot.slane %v188, 4
    %v190 = vadd.f32 %v188, %v189
    %v191 = vrot.slane %v190, 2
    %v192 = vadd.f32 %v190, %v191
    %v193 = vrot.slane %v192, 1
    %v194 = vadd.f32 %v192, %v193
    %v195 = vadd.f32 %v178, %v182
    %v196 = vadd.f32 %v195, %v186
    %v197 = vrot.slane %v196, 4
    %v198 = vadd.f32 %v196, %v197
    %v199 = vrot.slane %v198, 2
    %v200 = vadd.f32 %v198, %v199
    %v201 = vrot.slane %v200, 1
    %v202 = vadd.f32 %v200, %v201
    %v203 = vlog2.pop %v194
    %v204 = vmul.f32 %v203, 0.6931472
    %v205 = vlog2.pop %v202
    %v206 = vmul.f32 %v205, 0.6931472
    %v207 = vadd.f32 %v160, %v204
    %v208 = vadd.f32 %v168, %v206
    %v209 = vlaneseq
    %v210 = vshrl.u32 %v209, 7
    %v211 = vsub.s32 0, %v210
    %v212 = vrot.slane %v38, %v211
    %v213 = vlaneseq
    %v214 = vshrl.u32 %v213, 7
    %v215 = vsub.s32 2, %v214
    %v216 = vrot.slane %v38, %v215
    %v217 = vlaneseq
    %v218 = vshrl.u32 %v217, 7
    %v219 = vsub.s32 0, %v218
    %v220 = vrot.slane %v212, %v219
    %v221 = vlaneseq
    %v222 = vshrl.u32 %v221, 7
    %v223 = vsub.s32 0, %v222
    %v224 = vrot.slane %v216, %v223
    %vm225 = vcmp.eq.s32.totalorder %v40, %v220
    %vm226 = vcmp.eq.s32.totalorder %v40, %v224
    %vm227 = vcmp.eq.s32.totalorder %v41, %v220
    %vm228 = vcmp.eq.s32.totalorder %v41, %v224
    %vm229 = vcmp.eq.s32.totalorder %v42, %v220
    %vm230 = vcmp.eq.s32.totalorder %v42, %v224
    %v231 = vsel %vm225, %v147, 0.0
    %v232 = vsel %vm226, %v148, 0.0
    %v233 = vsel %vm227, %v149, 0.0
    %v234 = vsel %vm228, %v150, 0.0
    %v235 = vsel %vm229, %v151, 0.0
    %v236 = vsel %vm230, %v152, 0.0
    %v237 = vadd.f32 %v231, %v233
    %v238 = vadd.f32 %v237, %v235
    %v239 = vrot.slane %v238, 4
    %v240 = vadd.f32 %v238, %v239
    %v241 = vrot.slane %v240, 2
    %v242 = vadd.f32 %v240, %v241
    %v243 = vrot.slane %v242, 1
    %v244 = vadd.f32 %v242, %v243
    %v245 = vadd.f32 %v232, %v234
    %v246 = vadd.f32 %v245, %v236
    %v247 = vrot.slane %v246, 4
    %v248 = vadd.f32 %v246, %v247
    %v249 = vrot.slane %v248, 2
    %v250 = vadd.f32 %v248, %v249
    %v251 = vrot.slane %v250, 1
    %v252 = vadd.f32 %v250, %v251
    %254 = vset.pattern.permute.xlu0 0
    %255 = vperm.xlu0 %254, %v35
    %v256 = vpop.permute.xlu0 %255
    %259 = vset.pattern.permute.xlu0 0
    %260 = vperm.xlu0 %259, %v36
    %v261 = vpop.permute.xlu0 %260
    %264 = vset.pattern.permute.xlu0 0
    %265 = vperm.xlu0 %264, %v37
    %v266 = vpop.permute.xlu0 %265
    %v268 = vsel %vm225, %v256, 0.0
    %v269 = vsel %vm226, %v256, 0.0
    %v270 = vsel %vm227, %v261, 0.0
    %v271 = vsel %vm228, %v261, 0.0
    %v272 = vsel %vm229, %v266, 0.0
    %v273 = vsel %vm230, %v266, 0.0
    %v274 = vadd.f32 %v268, %v270
    %v275 = vadd.f32 %v274, %v272
    %v276 = vrot.slane %v275, 4
    %v277 = vadd.f32 %v275, %v276
    %v278 = vrot.slane %v277, 2
    %v279 = vadd.f32 %v277, %v278
    %v280 = vrot.slane %v279, 1
    %v281 = vadd.f32 %v279, %v280
    %v282 = vadd.f32 %v269, %v271
    %v283 = vadd.f32 %v282, %v273
    %v284 = vrot.slane %v283, 4
    %v285 = vadd.f32 %v283, %v284
    %v286 = vrot.slane %v285, 2
    %v287 = vadd.f32 %v285, %v286
    %v288 = vrot.slane %v287, 1
    %v289 = vadd.f32 %v287, %v288
    %vm290 = vcmp.ge.s32.totalorder %v38, 0
    %vm291 = vcmp.lt.s32.totalorder %v38, 19
    %vm292 = vmand %vm290, %vm291
    %vm293 = vcmp.ne.s32.totalorder %v38, 255
    %vm294 = vmand %vm292, %vm293
    %v295 = vsub.f32 %v207, %v244
    %v296 = vsub.f32 %v208, %v252
    %v297 = vmul.f32 %v281, %v295
    %v298 = vmul.f32 %v289, %v296
    %v301 = vcombine.low %v297, %v298
    %v303 = vunpack.c.l.s4 1983009808
    %v304 = vunpack.c.0.s8 %v303
    %v305 = vlaneseq
    %v306 = vshrl.u32 %v305, 7
    %v307 = vsub.s32 %v304, %v306
    %v308 = vrot.slane %v301, %v307
    %v310 = vsel %vm294, %v308, 0.0
    %v313 = vunpack.c.l.s4 1966171168
    %v314 = vunpack.c.0.s8 %v313
    %v315 = vlaneseq
    %v316 = vshrl.u32 %v315, 7
    %v317 = vsub.s32 %v314, %v316
    %v318 = vrot.slane %v310, %v317
    %v320 = vlaneseq
    %vm321 = vcmp.ge.s32.totalorder %v320, 0
    %vm322 = vcmp.lt.s32.totalorder %v320, 256
    %vm323 = vmand %vm321, %vm322
    %324 = vst.msk [vmem:[#allocation5] ss:$2 sm:$0x3] %vm323, %v318
    %s325 = scalar_lea.vmem [#allocation2], 64
    %v326 = vld [vmem:[%s325] sm:$0xff]
    %v327 = vld [vmem:[%s325 + $0x8] sm:$0xff]
    %v328 = vld [vmem:[%s325 + $0x10] sm:$0xff]
    %v329 = vld [vmem:[%s325 + $0x18] sm:$0xff]
    %v330 = vld [vmem:[%s325 + $0x20] sm:$0xff]
    %v331 = vld [vmem:[%s325 + $0x28] sm:$0xff]
    %v332 = vld [vmem:[%s325 + $0x30] sm:$0xff]
    %v333 = vld [vmem:[%s325 + $0x38] sm:$0xff]
    %334 = vmatprep.subr.mxu0 %v327
    %335 = vmatpush1.msra.mxu0 %v326
    %336 = vmatprep.subr.mxu0 %v329
    %337 = vmatpush1.msra.mxu0 %v328
    %338 = vmatprep.subr.mxu0 %v331
    %339 = vmatpush1.msra.mxu0 %v330
    %340 = vmatprep.subr.mxu0 %v333
    %341 = vmatpush1.msra.mxu0 %v332
    %342 = vmatprep.subr.mxu0 0.0
    %343 = vmatpush1.msra.mxu0 0.0
    %344 = vmatprep.subr.mxu0 0.0
    %345 = vmatpush1.msra.mxu0 0.0
    %346 = vmatprep.subr.mxu0 0.0
    %347 = vmatpush1.msra.mxu0 0.0
    %348 = vmatprep.subr.mxu0 0.0
    %349 = vmatpush1.msra.mxu0 0.0
    %350 = vmatprep.subr.mxu0 0.0
    %351 = vmatpush1.msra.mxu0 0.0
    %352 = vmatprep.subr.mxu0 0.0
    %353 = vmatpush1.msra.mxu0 0.0
    %354 = vmatprep.subr.mxu0 0.0
    %355 = vmatpush1.msra.mxu0 0.0
    %356 = vmatprep.subr.mxu0 0.0
    %357 = vmatpush1.msra.mxu0 0.0
    %358 = vmatprep.subr.mxu0 0.0
    %359 = vmatpush1.msra.mxu0 0.0
    %360 = vmatprep.subr.mxu0 0.0
    %361 = vmatpush1.msra.mxu0 0.0
    %362 = vmatprep.subr.mxu0 0.0
    %363 = vmatpush1.msra.mxu0 0.0
    %364 = vmatprep.subr.mxu0 0.0
    %365 = vmatpush1.msra.mxu0 0.0
    %366 = vmatprep.subr.mxu0 0.0
    %367 = vmatpush1.msra.mxu0 0.0
    %368 = vmatprep.subr.mxu0 0.0
    %369 = vmatpush1.msra.mxu0 0.0
    %370 = vmatprep.subr.mxu0 0.0
    %371 = vmatpush1.msra.mxu0 0.0
    %372 = vmatprep.subr.mxu0 0.0
    %373 = vmatpush1.msra.mxu0 0.0
    %374 = vmatprep.subr.mxu0 0.0
    %375 = vmatpush1.msra.mxu0 0.0
    %376 = vmatprep.subr.mxu0 0.0
    %377 = vmatpush1.msra.mxu0 0.0
    %378 = vmatprep.subr.mxu0 0.0
    %379 = vmatpush1.msra.mxu0 0.0
    %380 = vmatprep.subr.mxu0 0.0
    %381 = vmatpush1.msra.mxu0 0.0
    %382 = vmatprep.subr.mxu0 0.0
    %383 = vmatpush1.msra.mxu0 0.0
    %384 = vmatprep.subr.mxu0 0.0
    %385 = vmatpush1.msra.mxu0 0.0
    %386 = vmatprep.subr.mxu0 0.0
    %387 = vmatpush1.msra.mxu0 0.0
    %388 = vmatprep.subr.mxu0 0.0
    %389 = vmatpush1.msra.mxu0 0.0
    %390 = vmatprep.subr.mxu0 0.0
    %391 = vmatpush1.msra.mxu0 0.0
    %392 = vmatprep.subr.mxu0 0.0
    %393 = vmatpush1.msra.mxu0 0.0
    %394 = vmatprep.subr.mxu0 0.0
    %395 = vmatpush1.msra.mxu0 0.0
    %396 = vmatprep.subr.mxu0 0.0
    %397 = vmatpush1.msra.mxu0 0.0
    %398 = vmatprep.mubr.f32.mxu0 0.0
    %399 = vmatmul.mubr.f32.gmra.mrb[0].mxu0 %v56
    %v400 = vpop.f32.mrb[0].mxu0
    %v401 = vadd.f32 0.0, %v400
    %v402 = vpop.f32.mrb[0].mxu0
    %v403 = vadd.f32 0.0, %v402
    %404 = vmatprep.mubr.f32.mxu0 0.0
    %405 = vmatmul.mubr.f32.gmra.mrb[0].mxu0 %v59
    %v406 = vpop.f32.mrb[0].mxu0
    %v407 = vadd.f32 0.0, %v406
    %v408 = vpop.f32.mrb[0].mxu0
    %v409 = vadd.f32 0.0, %v408
    %410 = vmatprep.mubr.f32.mxu0 0.0
    %411 = vmatmul.mubr.f32.gmra.mrb[0].mxu0 %v62
    %v412 = vpop.f32.mrb[0].mxu0
    %v413 = vadd.f32 0.0, %v412
    %v414 = vpop.f32.mrb[0].mxu0
    %v415 = vadd.f32 0.0, %v414
    %416 = vdwg.mxu0
    %v417 = vsel %vm43, %v401, -1e+30
    %v418 = vsel %vm43, %v403, -1e+30
    %v419 = vsel %vm44, %v407, -1e+30
    %v420 = vsel %vm44, %v409, -1e+30
    %v421 = vsel %vm45, %v413, -1e+30
    %v422 = vsel %vm45, %v415, -1e+30
    %v423 = vmax.f32 %v417, %v421
    %v424 = vmax.f32 %v423, %v419
    %v425 = vrot.slane %v424, 4
    %v426 = vmax.f32 %v424, %v425
    %v427 = vrot.slane %v426, 2
    %v428 = vmax.f32 %v426, %v427
    %v429 = vrot.slane %v428, 1
    %v430 = vmax.f32 %v428, %v429
    %v431 = vmax.f32 %v418, %v422
    %v432 = vmax.f32 %v431, %v420
    %v433 = vrot.slane %v432, 4
    %v434 = vmax.f32 %v432, %v433
    %v435 = vrot.slane %v434, 2
    %v436 = vmax.f32 %v434, %v435
    %v437 = vrot.slane %v436, 1
    %v438 = vmax.f32 %v436, %v437
    %v439 = vsub.f32 %v417, %v430
    %v440 = vsub.f32 %v418, %v438
    %v441 = vsub.f32 %v419, %v430
    %v442 = vsub.f32 %v420, %v438
    %v443 = vsub.f32 %v421, %v430
    %v444 = vsub.f32 %v422, %v438
    %v445 = vmul.f32 %v439, 1.442695
    %v446 = vpow.pop %v445
    %v447 = vmul.f32 %v440, 1.442695
    %v448 = vpow.pop %v447
    %v449 = vmul.f32 %v441, 1.442695
    %v450 = vpow.pop %v449
    %v451 = vmul.f32 %v442, 1.442695
    %v452 = vpow.pop %v451
    %v453 = vmul.f32 %v443, 1.442695
    %v454 = vpow.pop %v453
    %v455 = vmul.f32 %v444, 1.442695
    %v456 = vpow.pop %v455
    %v457 = vadd.f32 %v446, %v450
    %v458 = vadd.f32 %v457, %v454
    %v459 = vrot.slane %v458, 4
    %v460 = vadd.f32 %v458, %v459
    %v461 = vrot.slane %v460, 2
    %v462 = vadd.f32 %v460, %v461
    %v463 = vrot.slane %v462, 1
    %v464 = vadd.f32 %v462, %v463
    %v465 = vadd.f32 %v448, %v452
    %v466 = vadd.f32 %v465, %v456
    %v467 = vrot.slane %v466, 4
    %v468 = vadd.f32 %v466, %v467
    %v469 = vrot.slane %v468, 2
    %v470 = vadd.f32 %v468, %v469
    %v471 = vrot.slane %v470, 1
    %v472 = vadd.f32 %v470, %v471
    %v473 = vlog2.pop %v464
    %v474 = vmul.f32 %v473, 0.6931472
    %v475 = vlog2.pop %v472
    %v476 = vmul.f32 %v475, 0.6931472
    %v477 = vadd.f32 %v430, %v474
    %v478 = vadd.f32 %v438, %v476
    %v479 = vlaneseq
    %v480 = vshrl.u32 %v479, 7
    %v481 = vsub.s32 1, %v480
    %v482 = vrot.slane %v38, %v481
    %v483 = vlaneseq
    %v484 = vshrl.u32 %v483, 7
    %v485 = vsub.s32 3, %v484
    %v486 = vrot.slane %v38, %v485
    %v487 = vlaneseq
    %v488 = vshrl.u32 %v487, 7
    %v489 = vsub.s32 1, %v488
    %v490 = vrot.slane %v482, %v489
    %v491 = vlaneseq
    %v492 = vshrl.u32 %v491, 7
    %v493 = vsub.s32 1, %v492
    %v494 = vrot.slane %v486, %v493
    %vm495 = vcmp.eq.s32.totalorder %v40, %v490
    %vm496 = vcmp.eq.s32.totalorder %v40, %v494
    %vm497 = vcmp.eq.s32.totalorder %v41, %v490
    %vm498 = vcmp.eq.s32.totalorder %v41, %v494
    %vm499 = vcmp.eq.s32.totalorder %v42, %v490
    %vm500 = vcmp.eq.s32.totalorder %v42, %v494
    %v501 = vsel %vm495, %v417, 0.0
    %v502 = vsel %vm496, %v418, 0.0
    %v503 = vsel %vm497, %v419, 0.0
    %v504 = vsel %vm498, %v420, 0.0
    %v505 = vsel %vm499, %v421, 0.0
    %v506 = vsel %vm500, %v422, 0.0
    %v507 = vadd.f32 %v501, %v503
    %v508 = vadd.f32 %v507, %v505
    %v509 = vrot.slane %v508, 4
    %v510 = vadd.f32 %v508, %v509
    %v511 = vrot.slane %v510, 2
    %v512 = vadd.f32 %v510, %v511
    %v513 = vrot.slane %v512, 1
    %v514 = vadd.f32 %v512, %v513
    %v515 = vadd.f32 %v502, %v504
    %v516 = vadd.f32 %v515, %v506
    %v517 = vrot.slane %v516, 4
    %v518 = vadd.f32 %v516, %v517
    %v519 = vrot.slane %v518, 2
    %v520 = vadd.f32 %v518, %v519
    %v521 = vrot.slane %v520, 1
    %v522 = vadd.f32 %v520, %v521
    %v523 = vsel %vm495, %v256, 0.0
    %v524 = vsel %vm496, %v256, 0.0
    %v525 = vsel %vm497, %v261, 0.0
    %v526 = vsel %vm498, %v261, 0.0
    %v527 = vsel %vm499, %v266, 0.0
    %v528 = vsel %vm500, %v266, 0.0
    %v529 = vadd.f32 %v523, %v525
    %v530 = vadd.f32 %v529, %v527
    %v531 = vrot.slane %v530, 4
    %v532 = vadd.f32 %v530, %v531
    %v533 = vrot.slane %v532, 2
    %v534 = vadd.f32 %v532, %v533
    %v535 = vrot.slane %v534, 1
    %v536 = vadd.f32 %v534, %v535
    %v537 = vadd.f32 %v524, %v526
    %v538 = vadd.f32 %v537, %v528
    %v539 = vrot.slane %v538, 4
    %v540 = vadd.f32 %v538, %v539
    %v541 = vrot.slane %v540, 2
    %v542 = vadd.f32 %v540, %v541
    %v543 = vrot.slane %v542, 1
    %v544 = vadd.f32 %v542, %v543
    %v545 = vsub.f32 %v477, %v514
    %v546 = vsub.f32 %v478, %v522
    %v547 = vmul.f32 %v536, %v545
    %v548 = vmul.f32 %v544, %v546
    %v551 = vcombine.low %v547, %v548
    %v553 = vunpack.c.l.s4 1983009808
    %v554 = vunpack.c.0.s8 %v553
    %v555 = vlaneseq
    %v556 = vshrl.u32 %v555, 7
    %v557 = vsub.s32 %v554, %v556
    %v558 = vrot.slane %v551, %v557
    %v559 = vrot.slane %v558, 7
    %v561 = vsel %vm294, %v559, 0.0
    %v564 = vunpack.c.l.s4 1966171168
    %v565 = vunpack.c.0.s8 %v564
    %v566 = vlaneseq
    %v567 = vshrl.u32 %v566, 7
    %v568 = vsub.s32 %v565, %v567
    %v569 = vrot.slane %v561, %v568
    %v570 = vcombine.high %v569, %v569
    %s572 = scalar_lea.vmem [#allocation5], 1
    %573 = vst.msk [vmem:[%s572] ss:$2 sm:$0x3] %vm323, %v570
    // Predicated region
    $region22: #{tpu_custom_call.1} parent=1 // pred_check
      _
    $region23: #{tpu_custom_call.1} parent=1 // pred_check_branch
      %575 = sbr.rel (0) target = $region25
    $region24: #{tpu_custom_call.1} parent=1 // pred_region
      %s577 = ssub.s32 64, 64
      %578 = vsyncadd [#allocation4], %s577
      %s580 = sshll.u32 [#allocation5], 4
      %s581 = int_to_ptr.vmem [resolvable:$true] %s580
      %583 = dma.vmem_to_hbm [thread:$0]  %s581, 64, %s4, [#allocation4]
    $region25: #{tpu_custom_call.1} parent=1 // pred_fallthru
      _
    // Predicated region
    $region26: #{tpu_custom_call.1} parent=1 // pred_check
      _
    $region27: #{tpu_custom_call.1} parent=1 // pred_check_branch
      %585 = sbr.rel (0) target = $region29
    $region28: #{tpu_custom_call.1} parent=1 // pred_region
      %586 = dma.done [#allocation4], 64
    $region29: #{tpu_custom_call.1} parent=1 // pred_fallthru
      _
    %587 = vsyncpa [#allocation3], 1
    %588 = vsyncpa [#allocation4], 1

</llo_original>
